<compile_context>
chip_gen: v7x
topology: tpu7x:2x2x1
jax: 0.10.0
libtpu: 0.0.40
codegen_flags: <defaults>
</compile_context>

<pallas_src>
import jax
import jax.numpy as jnp
from jax.experimental import pallas as pl
from jax.experimental.pallas import tpu as pltpu


# ----------------------------------------------------------------------------- 
# Kernel
# -----------------------------------------------------------------------------
def reduced_decoder_kernel(x_ref,    # VMEM (TB, R) bf16  reduced latent tile
                           w1_ref,   # VMEM (R, H)  bf16  gathered (+ dedup-masked) rows of W1
                           b1_ref,   # VMEM (1, H)  f32
                           w2_ref,   # VMEM (H, O)  bf16
                           b2_ref,   # VMEM (1, O)  f32
                           out_ref):  # VMEM (TB, O) bf16
    # Layer 1: (TB, R) @ (R, H), f32 accumulation on the MXU.
    h = jnp.dot(x_ref[...], w1_ref[...], preferred_element_type=jnp.float32)
    h = jnp.maximum(h + b1_ref[...], 0.0)                        # f32 VPU

    # Layer 2: (TB, H) @ (H, O), f32 accumulation on the MXU.
    y = jnp.dot(h.astype(jnp.bfloat16), w2_ref[...],
                preferred_element_type=jnp.float32)
    z = y + b2_ref[...]

    # sigmoid(z) = 1 / (1 + exp(-z)); exp on the EUP, divide via approx vrcp.
    s = pl.reciprocal(1.0 + jnp.exp(-z), approx=True)
    out_ref[...] = s.astype(out_ref.dtype)                       # bf16 store


# -----------------------------------------------------------------------------
# One-time preprocessing (hoisted out of the steady-state call path)
# -----------------------------------------------------------------------------
def prepare_reduced_decoder_params(selected_features, w1, b1, w2, b2, full_dim):
    """Gather W1 rows, fold in last-write-wins dedup mask, cast weights to bf16."""
    assert w1.shape[0] == full_dim
    R = selected_features.shape[0]

    # PyTorch advanced-indexing assignment: for duplicate indices the LAST
    # column wins.  Zero the W1 rows of all non-final duplicates so that
    #   x @ (keep[:,None] * W1[selected_features]) == scatter_lastwins(x) @ W1
    pos = jnp.arange(R)
    dup_later = ((selected_features[:, None] == selected_features[None, :])
                 & (pos[None, :] > pos[:, None]))
    keep = jnp.logical_not(jnp.any(dup_later, axis=1)).astype(w1.dtype)

    w1_sel = (keep[:, None] * w1[selected_features]).astype(jnp.bfloat16)  # (R, H)
    return dict(
        w1_sel=w1_sel,
        b1=b1.astype(jnp.float32).reshape(1, -1),
        w2=w2.astype(jnp.bfloat16),
        b2=b2.astype(jnp.float32).reshape(1, -1),
    )


def _tensorcores_per_chip():
    """Best-effort TC count: 2 on v7x, 1 on v5e/v6e (perf-only decision)."""
    try:
        kind = jax.devices()[0].device_kind.lower()
    except Exception:
        return 1
    return 2 if "v7" in kind else 1


# -----------------------------------------------------------------------------
# Wrapper
# -----------------------------------------------------------------------------
def reduced_decoder(reduced_latent, params, *, out_dtype=jnp.bfloat16):
    B, R = reduced_latent.shape
    H = params["w1_sel"].shape[1]
    O = params["w2"].shape[1]

    # Steady-state per-call work: only a bf16 cast (+ optional pad) of x.
    # NOTE: bf16 input quantization is an intentional deviation from fp32
    # PyTorch semantics (f32 accumulation on the MXU keeps the error ~1e-3).
    x = reduced_latent.astype(jnp.bfloat16)

    # One batch tile per TensorCore: grid=(1,) on v5e/v6e, grid=(2,) on v7x.
    num_tc = _tensorcores_per_chip()
    tb = max(8, ((pl.cdiv(B, num_tc) + 7) // 8) * 8)   # sublane-multiple rows
    b_pad = pl.cdiv(B, tb) * tb
    if b_pad != B:
        x = jnp.pad(x, ((0, b_pad - B), (0, 0)))

    grid_spec = pltpu.PrefetchScalarGridSpec(
        num_scalar_prefetch=0,
        grid=(b_pad // tb,),
        in_specs=[
            pl.BlockSpec((tb, R), lambda i: (i, 0)),   # activations: per batch tile
            # Resident weights/biases (constant index_map). At realistic H/O
            # sizes these should be single-buffered (pipeline_mode=pl.Buffered(1))
            # and W2 tiled along O; unnecessary at these shapes.
            pl.BlockSpec((R, H), lambda i: (0, 0)),
            pl.BlockSpec((1, H), lambda i: (0, 0)),
            pl.BlockSpec((H, O), lambda i: (0, 0)),
            pl.BlockSpec((1, O), lambda i: (0, 0)),
        ],
        out_specs=pl.BlockSpec((tb, O), lambda i: (i, 0)),
    )

    out = pl.pallas_call(
        reduced_decoder_kernel,
        out_shape=jax.ShapeDtypeStruct((b_pad, O), out_dtype),
        grid_spec=grid_spec,
        compiler_params=pltpu.CompilerParams(
            dimension_semantics=("parallel",)),
    )(x, params["w1_sel"], params["b1"], params["w2"], params["b2"])

    return out[:B] if b_pad != B else out


# -----------------------------------------------------------------------------
# PyTorch-faithful reference (fp32, explicit last-write-wins scatter)
# -----------------------------------------------------------------------------
def reference(reduced_latent, selected_features, w1, b1, w2, b2, full_dim):
    B, R = reduced_latent.shape
    full = jnp.zeros((B, full_dim), jnp.float32)
    for i in range(R):                                  # sequential => last write wins
        full = full.at[:, int(selected_features[i])].set(reduced_latent[:, i])
    h = jnp.maximum(full @ w1 + b1, 0.0)
    return jax.nn.sigmoid(h @ w2 + b2)


if __name__ == "__main__":
    # Small, lane-dense shapes implied by the forward pass.
    B = 128        # batch
    R = 16         # reduced latent dim (len(selected_features))
    FULL = 64      # full latent dim
    HID = 128      # decoder hidden dim   (multiple of 128 -> lane-dense)
    OUT = 256      # decoder output dim   (multiple of 128 -> lane-dense)

    key = jax.random.PRNGKey(0)
    kx, k1, k2, kb1, kb2 = jax.random.split(key, 5)

    reduced_latent = jax.random.normal(kx, (B, R), dtype=jnp.float32)

    # Synthetic decoder parameters (original_decoder not given in the source).
    w1 = jax.random.normal(k1, (FULL, HID), dtype=jnp.float32) * 0.1
    b1 = jax.random.normal(kb1, (1, HID), dtype=jnp.float32) * 0.01
    w2 = jax.random.normal(k2, (HID, OUT), dtype=jnp.float32) * 0.1
    b2 = jax.random.normal(kb2, (1, OUT), dtype=jnp.float32) * 0.01

    test_cases = {
        "unique": jnp.array(
            [3, 7, 1, 12, 25, 30, 5, 18, 40, 33, 9, 60, 47, 22, 55, 0],
            dtype=jnp.int32),
        # Duplicate indices: exercises PyTorch last-write-wins semantics.
        "duplicates": jnp.array(
            [3, 7, 3, 12, 25, 7, 5, 18, 40, 33, 9, 60, 40, 22, 55, 3],
            dtype=jnp.int32),
    }

    ok = True
    for name, selected_features in test_cases.items():
        params = prepare_reduced_decoder_params(
            selected_features, w1, b1, w2, b2, FULL)           # one-time prep
        out = reduced_decoder(reduced_latent, params)          # steady-state call
        out = jax.block_until_ready(out)

        ref = reference(reduced_latent, selected_features, w1, b1, w2, b2, FULL)
        assert out.shape == (B, OUT)
        # bf16 operands / bf16 output vs fp32 reference -> loose tolerance.
        if not jnp.allclose(out.astype(jnp.float32), ref, atol=2e-2, rtol=2e-2):
            ok = False
            print(f"mismatch vs reference in case '{name}'")

    if ok:
        print("KERNEL_OK")
</pallas_src>

<mosaic_0001>
module attributes {stable_mosaic.version = 11 : i64} {
  func.func @reduced_decoder_kernel(%arg0: i32, %arg1: memref<128x16xbf16, #tpu.memory_space<vmem>>, %arg2: memref<16x128xbf16, #tpu.memory_space<vmem>>, %arg3: memref<1x128xf32, #tpu.memory_space<vmem>>, %arg4: memref<128x256xbf16, #tpu.memory_space<vmem>>, %arg5: memref<1x256xf32, #tpu.memory_space<vmem>>, %arg6: memref<128x256xbf16, #tpu.memory_space<vmem>>) attributes {dimension_semantics = [#tpu.dimension_semantics<parallel>], iteration_bounds = array<i64: 1>, scalar_prefetch = 0 : i64, scratch_operands = 0 : i64, tpu.core_type = #tpu.core_type<tc>, window_params = [{transform_indices = @transform_0, window_bounds = array<i64: 128, 16>}, {pipeline_mode = #tpu.pipeline_mode<synchronous>, transform_indices = @transform_1, window_bounds = array<i64: 16, 128>}, {pipeline_mode = #tpu.pipeline_mode<synchronous>, transform_indices = @transform_2, window_bounds = array<i64: 1, 128>}, {pipeline_mode = #tpu.pipeline_mode<synchronous>, transform_indices = @transform_3, window_bounds = array<i64: 128, 256>}, {pipeline_mode = #tpu.pipeline_mode<synchronous>, transform_indices = @transform_4, window_bounds = array<i64: 1, 256>}, {transform_indices = @transform_5, window_bounds = array<i64: 128, 256>}]} {
    %c0 = arith.constant 0 : index
    %c0_0 = arith.constant 0 : index
    %0 = vector.load %arg1[%c0, %c0_0] : memref<128x16xbf16, #tpu.memory_space<vmem>>, vector<128x16xbf16>
    %c0_1 = arith.constant 0 : index
    %c0_2 = arith.constant 0 : index
    %1 = vector.load %arg2[%c0_1, %c0_2] : memref<16x128xbf16, #tpu.memory_space<vmem>>, vector<16x128xbf16>
    %cst = arith.constant dense<0.000000e+00> : vector<128x128xf32>
    %2 = tpu.matmul %0, %1, %cst {dimension_numbers = #tpu.dot_dimension_numbers<[1], [0], [0], [1], [0, 0, 1, 1], [], []>} : vector<128x16xbf16>, vector<16x128xbf16>, vector<128x128xf32> -> vector<128x128xf32>
    %c0_3 = arith.constant 0 : index
    %c0_4 = arith.constant 0 : index
    %3 = vector.load %arg3[%c0_3, %c0_4] : memref<1x128xf32, #tpu.memory_space<vmem>>, vector<1x128xf32>
    %4 = vector.broadcast %3 : vector<1x128xf32> to vector<128x128xf32>
    %5 = arith.addf %2, %4 : vector<128x128xf32>
    %cst_5 = arith.constant 0.000000e+00 : f32
    %6 = vector.broadcast %cst_5 : f32 to vector<128x128xf32>
    %7 = arith.maximumf %5, %6 : vector<128x128xf32>
    %8 = arith.truncf %7 : vector<128x128xf32> to vector<128x128xbf16>
    %c0_6 = arith.constant 0 : index
    %c0_7 = arith.constant 0 : index
    %9 = vector.load %arg4[%c0_6, %c0_7] : memref<128x256xbf16, #tpu.memory_space<vmem>>, vector<128x256xbf16>
    %cst_8 = arith.constant dense<0.000000e+00> : vector<128x256xf32>
    %10 = tpu.matmul %8, %9, %cst_8 {dimension_numbers = #tpu.dot_dimension_numbers<[1], [0], [0], [1], [0, 0, 1, 1], [], []>} : vector<128x128xbf16>, vector<128x256xbf16>, vector<128x256xf32> -> vector<128x256xf32>
    %c0_9 = arith.constant 0 : index
    %c0_10 = arith.constant 0 : index
    %11 = vector.load %arg5[%c0_9, %c0_10] : memref<1x256xf32, #tpu.memory_space<vmem>>, vector<1x256xf32>
    %12 = vector.broadcast %11 : vector<1x256xf32> to vector<128x256xf32>
    %13 = arith.addf %10, %12 : vector<128x256xf32>
    %cst_11 = arith.constant 0.000000e+00 : f32
    %14 = vector.broadcast %cst_11 : f32 to vector<128x256xf32>
    %15 = arith.subf %14, %13 : vector<128x256xf32>
    %16 = math.exp %15 : vector<128x256xf32>
    %cst_12 = arith.constant 1.000000e+00 : f32
    %17 = vector.broadcast %cst_12 : f32 to vector<128x256xf32>
    %18 = arith.addf %17, %16 : vector<128x256xf32>
    %19 = tpu.reciprocal %18 {approx = true} : vector<128x256xf32> -> vector<128x256xf32>
    %20 = arith.truncf %19 : vector<128x256xf32> to vector<128x256xbf16>
    %c0_13 = arith.constant 0 : index
    %c0_14 = arith.constant 0 : index
    %21 = vector.load %arg6[%c0_13, %c0_14] : memref<128x256xbf16, #tpu.memory_space<vmem>>, vector<128x256xbf16>
    tpu.vector_store %arg6[%c0_13, %c0_14], %20 {strides = array<i32>} : memref<128x256xbf16, #tpu.memory_space<vmem>>, vector<128x256xbf16>,
    return
  }
  func.func @transform_0(%arg0: i32) -> (i32, i32) {
    %c0_i32 = arith.constant 0 : i32
    %c0_i32_0 = arith.constant 0 : i32
    return %arg0, %c0_i32 : i32, i32
  }
  func.func @transform_1(%arg0: i32) -> (i32, i32) {
    %c0_i32 = arith.constant 0 : i32
    %c0_i32_0 = arith.constant 0 : i32
    %c0_i32_1 = arith.constant 0 : i32
    return %c0_i32, %c0_i32_0 : i32, i32
  }
  func.func @transform_2(%arg0: i32) -> (i32, i32) {
    %c0_i32 = arith.constant 0 : i32
    %c0_i32_0 = arith.constant 0 : i32
    %c0_i32_1 = arith.constant 0 : i32
    return %c0_i32, %c0_i32_0 : i32, i32
  }
  func.func @transform_3(%arg0: i32) -> (i32, i32) {
    %c0_i32 = arith.constant 0 : i32
    %c0_i32_0 = arith.constant 0 : i32
    %c0_i32_1 = arith.constant 0 : i32
    return %c0_i32, %c0_i32_0 : i32, i32
  }
  func.func @transform_4(%arg0: i32) -> (i32, i32) {
    %c0_i32 = arith.constant 0 : i32
    %c0_i32_0 = arith.constant 0 : i32
    %c0_i32_1 = arith.constant 0 : i32
    return %c0_i32, %c0_i32_0 : i32, i32
  }
  func.func @transform_5(%arg0: i32) -> (i32, i32) {
    %c0_i32 = arith.constant 0 : i32
    %c0_i32_0 = arith.constant 0 : i32
    return %arg0, %c0_i32 : i32, i32
  }
}

</mosaic_0001>

<llo_original>
// kernel: tpu_custom_call.1
$region0: #{tpu_custom_call.1}
  #allocation0 [shape = 'u32[]', space=smem, size = 0x4, offset = 0x4, fixed_abs, tag = 'smem constant byte address 0x4 - core index']
  #allocation1 [shape = 'u32[144,128]{1,0:T(1,128)}', space=vmem, size = 0x12000, scoped, tag = 'internal scratch']
  %s0 = inlined_call_operand.vmem [shape: bf16[128,16], index: 0, kind: input, shape index: {}]
  %s1 = inlined_call_operand.vmem [shape: bf16[16,128], index: 1, kind: input, shape index: {}]
  %s2 = inlined_call_operand.vmem [shape: f32[1,128], index: 2, kind: input, shape index: {}]
  %s3 = inlined_call_operand.hbm [shape: bf16[128,256], index: 3, kind: input, shape index: {}]
  %s4 = inlined_call_operand.vmem [shape: f32[1,256], index: 4, kind: input, shape index: {}]
  %s5 = inlined_call_operand.hbm [shape: bf16[128,256], index: 5, kind: output, shape index: {}]
  %s6 = sld [smem:[#allocation0]]
  $region34: #{tpu_custom_call.1} parent=0
    _
  %s8 = ssub.s32 1, %s6
  %s9 = scalar_select 0, %s8, %s6
  $region1: #{tpu_custom_call.1} parent=0
    #allocation2 [shape = 'u8[65536]{0}', space=vmem, size = 0x10000, scoped, tag = 'input window, operand 3, single buffered']
    #allocation3 [shape = 's32[1]{0}', space=sflag, size = 0x4, scoped, tag = 'scoped memory for tpu_custom_call.1']
    #allocation4 [shape = 's32[1]{0}', space=sflag, size = 0x4, scoped, tag = 'scoped memory for tpu_custom_call.1']
    #allocation5 [shape = 'u8[65536]{0}', space=vmem, size = 0x10000, scoped, tag = 'output window, operand 0, single buffered']
    %10 = vsyncpa [#allocation3], 0
    %11 = vsyncpa [#allocation4], 0
    // Predicated region
    $region2: #{tpu_custom_call.1} parent=1 // pred_check
      _
    $region3: #{tpu_custom_call.1} parent=1 // pred_check_branch
      %13 = sbr.rel (0) target = $region5
    $region4: #{tpu_custom_call.1} parent=1 // pred_region
      _
    $region5: #{tpu_custom_call.1} parent=1 // pred_fallthru
      _
    // Predicated region
    $region6: #{tpu_custom_call.1} parent=1 // pred_check
      _
    $region7: #{tpu_custom_call.1} parent=1 // pred_check_branch
      %15 = sbr.rel (0) target = $region9
    $region8: #{tpu_custom_call.1} parent=1 // pred_region
      _
    $region9: #{tpu_custom_call.1} parent=1 // pred_fallthru
      _
    // Predicated region
    $region10: #{tpu_custom_call.1} parent=1 // pred_check
      _
    $region11: #{tpu_custom_call.1} parent=1 // pred_check_branch
      %17 = sbr.rel (0) target = $region13
    $region12: #{tpu_custom_call.1} parent=1 // pred_region
      _
    $region13: #{tpu_custom_call.1} parent=1 // pred_fallthru
      _
    // Predicated region
    $region14: #{tpu_custom_call.1} parent=1 // pred_check
      _
    $region15: #{tpu_custom_call.1} parent=1 // pred_check_branch
      %19 = sbr.rel (0) target = $region17
    $region16: #{tpu_custom_call.1} parent=1 // pred_region
      %s21 = ssub.s32 2048, 2048
      %22 = vsyncadd [#allocation3], %s21
      %s23 = sshll.u32 [#allocation2], 4
      %s24 = int_to_ptr.vmem [resolvable:$true] %s23
      %29 = dma.hbm_to_vmem [thread:$0]  %s3, 2048, %s24, [#allocation3], 128, 128, 8
    $region17: #{tpu_custom_call.1} parent=1 // pred_fallthru
      _
    // Predicated region
    $region18: #{tpu_custom_call.1} parent=1 // pred_check
      _
    $region19: #{tpu_custom_call.1} parent=1 // pred_check_branch
      %31 = sbr.rel (0) target = $region21
    $region20: #{tpu_custom_call.1} parent=1 // pred_region
      _
    $region21: #{tpu_custom_call.1} parent=1 // pred_fallthru
      _
    // Predicated region
    $region22: #{tpu_custom_call.1} parent=1 // pred_check
      _
    $region23: #{tpu_custom_call.1} parent=1 // pred_check_branch
      %33 = sbr.rel (0) target = $region25
    $region24: #{tpu_custom_call.1} parent=1 // pred_region
      %34 = dma.done [#allocation3], 2048
    $region25: #{tpu_custom_call.1} parent=1 // pred_fallthru
      _
    %v36 = vld [vmem:[%s0] sm:$0xf]
    %v37 = vld [vmem:[%s0 + $0x4] sm:$0xf]
    %v38 = vld [vmem:[%s0 + $0x8] sm:$0xf]
    %v39 = vld [vmem:[%s0 + $0xc] sm:$0xf]
    %v40 = vld [vmem:[%s0 + $0x10] sm:$0xf]
    %v41 = vld [vmem:[%s0 + $0x14] sm:$0xf]
    %v42 = vld [vmem:[%s0 + $0x18] sm:$0xf]
    %v43 = vld [vmem:[%s0 + $0x1c] sm:$0xf]
    %v44 = vld [vmem:[%s0 + $0x20] sm:$0xf]
    %v45 = vld [vmem:[%s0 + $0x24] sm:$0xf]
    %v46 = vld [vmem:[%s0 + $0x28] sm:$0xf]
    %v47 = vld [vmem:[%s0 + $0x2c] sm:$0xf]
    %v48 = vld [vmem:[%s0 + $0x30] sm:$0xf]
    %v49 = vld [vmem:[%s0 + $0x34] sm:$0xf]
    %v50 = vld [vmem:[%s0 + $0x38] sm:$0xf]
    %v51 = vld [vmem:[%s0 + $0x3c] sm:$0xf]
    %v52 = vld [vmem:[%s1] sm:$0xf]
    %v53 = vld [vmem:[%s1 + $0x4] sm:$0xf]
    %v54 = vld [vmem:[%s2] sm:$0x1]
    %v56 = vlaneseq
    %v57 = vshrl.u32 %v56, 7
    %v58 = vsub.s32 0, %v57
    %v59 = vrot.slane %v54, %v58
    %v77 = vunpack.c.l.b16 %v36
    %v78 = vunpack.c.l.b16 %v37
    %v79 = vunpack.c.l.b16 %v38
    %v80 = vunpack.c.l.b16 %v39
    %v81 = vunpack.c.l.b16 %v40
    %v82 = vunpack.c.l.b16 %v41
    %v83 = vunpack.c.l.b16 %v42
    %v84 = vunpack.c.l.b16 %v43
    %v85 = vunpack.c.l.b16 %v44
    %v86 = vunpack.c.l.b16 %v45
    %v87 = vunpack.c.l.b16 %v46
    %v88 = vunpack.c.l.b16 %v47
    %v89 = vunpack.c.l.b16 %v48
    %v90 = vunpack.c.l.b16 %v49
    %v91 = vunpack.c.l.b16 %v50
    %v92 = vunpack.c.l.b16 %v51
    %v93 = vpack.c.b16 %v78, %v77
    %v94 = vpack.c.b16 %v80, %v79
    %v95 = vpack.c.b16 %v82, %v81
    %v96 = vpack.c.b16 %v84, %v83
    %v97 = vpack.c.b16 %v86, %v85
    %v98 = vpack.c.b16 %v88, %v87
    %v99 = vpack.c.b16 %v90, %v89
    %v100 = vpack.c.b16 %v92, %v91
    %v103 = vunpack.c.l.b16 %v52
    %v104 = vunpack.c.l.b16 %v53
    %v105 = vpack.c.b16 %v104, %v103
    %vm107 = vcmask 130048
    %v109 = vsel %vm107, %v93, 0
    %v112 = vsel %vm107, %v94, 0
    %v115 = vsel %vm107, %v95, 0
    %v118 = vsel %vm107, %v96, 0
    %v121 = vsel %vm107, %v97, 0
    %v124 = vsel %vm107, %v98, 0
    %v127 = vsel %vm107, %v99, 0
    %v130 = vsel %vm107, %v100, 0
    %132 = vmatprep.subr.bf16.mxu0 0
    %133 = vmatpush1.bf16.msra.mxu0 %v105
    %134 = vmatprep.subr.bf16.mxu0 0
    %135 = vmatpush1.bf16.msra.mxu0 0
    %136 = vmatprep.subr.bf16.mxu0 0
    %137 = vmatpush1.bf16.msra.mxu0 0
    %138 = vmatprep.subr.bf16.mxu0 0
    %139 = vmatpush1.bf16.msra.mxu0 0
    %140 = vmatprep.subr.bf16.mxu0 0
    %141 = vmatpush1.bf16.msra.mxu0 0
    %142 = vmatprep.subr.bf16.mxu0 0
    %143 = vmatpush1.bf16.msra.mxu0 0
    %144 = vmatprep.subr.bf16.mxu0 0
    %145 = vmatpush1.bf16.msra.mxu0 0
    %146 = vmatprep.subr.bf16.mxu0 0
    %147 = vmatpush1.bf16.msra.mxu0 0
    %148 = vmatprep.subr.bf16.mxu0 0
    %149 = vmatpush1.bf16.msra.mxu0 0
    %150 = vmatprep.subr.bf16.mxu0 0
    %151 = vmatpush1.bf16.msra.mxu0 0
    %152 = vmatprep.subr.bf16.mxu0 0
    %153 = vmatpush1.bf16.msra.mxu0 0
    %154 = vmatprep.subr.bf16.mxu0 0
    %155 = vmatpush1.bf16.msra.mxu0 0
    %156 = vmatprep.subr.bf16.mxu0 0
    %157 = vmatpush1.bf16.msra.mxu0 0
    %158 = vmatprep.subr.bf16.mxu0 0
    %159 = vmatpush1.bf16.msra.mxu0 0
    %160 = vmatprep.subr.bf16.mxu0 0
    %161 = vmatpush1.bf16.msra.mxu0 0
    %162 = vmatprep.subr.bf16.mxu0 0
    %163 = vmatpush1.bf16.msra.mxu0 0
    %164 = vmatprep.mubr.bf16.mxu0 0
    %165 = vmatmul.mubr.bf16.gmra.mrb[0].mxu0 %v109
    %v166 = vpop.f32.mrb[0].mxu0
    %v167 = vadd.f32 %v59, %v166
    %v168 = vpop.f32.mrb[0].mxu0
    %v169 = vpop.f32.mrb[0].mxu0
    %v170 = vadd.f32 %v59, %v169
    %v171 = vpop.f32.mrb[0].mxu0
    %172 = vmatprep.mubr.bf16.mxu0 0
    %173 = vmatmul.mubr.bf16.gmra.mrb[0].mxu0 %v112
    %v174 = vpop.f32.mrb[0].mxu0
    %v175 = vadd.f32 %v59, %v174
    %v176 = vpop.f32.mrb[0].mxu0
    %v177 = vpop.f32.mrb[0].mxu0
    %v178 = vadd.f32 %v59, %v177
    %v179 = vpop.f32.mrb[0].mxu0
    %180 = vmatprep.mubr.bf16.mxu0 0
    %181 = vmatmul.mubr.bf16.gmra.mrb[0].mxu0 %v115
    %v182 = vpop.f32.mrb[0].mxu0
    %v183 = vadd.f32 %v59, %v182
    %v184 = vpop.f32.mrb[0].mxu0
    %v185 = vpop.f32.mrb[0].mxu0
    %v186 = vadd.f32 %v59, %v185
    %v187 = vpop.f32.mrb[0].mxu0
    %188 = vmatprep.mubr.bf16.mxu0 0
    %189 = vmatmul.mubr.bf16.gmra.mrb[0].mxu0 %v118
    %v190 = vpop.f32.mrb[0].mxu0
    %v191 = vadd.f32 %v59, %v190
    %v192 = vpop.f32.mrb[0].mxu0
    %v193 = vpop.f32.mrb[0].mxu0
    %v194 = vadd.f32 %v59, %v193
    %v195 = vpop.f32.mrb[0].mxu0
    %196 = vmatprep.mubr.bf16.mxu0 0
    %197 = vmatmul.mubr.bf16.gmra.mrb[0].mxu0 %v121
    %v198 = vpop.f32.mrb[0].mxu0
    %v199 = vadd.f32 %v59, %v198
    %v200 = vpop.f32.mrb[0].mxu0
    %v201 = vpop.f32.mrb[0].mxu0
    %v202 = vadd.f32 %v59, %v201
    %v203 = vpop.f32.mrb[0].mxu0
    %204 = vmatprep.mubr.bf16.mxu0 0
    %205 = vmatmul.mubr.bf16.gmra.mrb[0].mxu0 %v124
    %v206 = vpop.f32.mrb[0].mxu0
    %v207 = vadd.f32 %v59, %v206
    %v208 = vpop.f32.mrb[0].mxu0
    %v209 = vpop.f32.mrb[0].mxu0
    %v210 = vadd.f32 %v59, %v209
    %v211 = vpop.f32.mrb[0].mxu0
    %212 = vmatprep.mubr.bf16.mxu0 0
    %213 = vmatmul.mubr.bf16.gmra.mrb[0].mxu0 %v127
    %v214 = vpop.f32.mrb[0].mxu0
    %v215 = vadd.f32 %v59, %v214
    %v216 = vpop.f32.mrb[0].mxu0
    %v217 = vpop.f32.mrb[0].mxu0
    %v218 = vadd.f32 %v59, %v217
    %v219 = vpop.f32.mrb[0].mxu0
    %220 = vmatprep.mubr.bf16.mxu0 0
    %221 = vmatmul.mubr.bf16.gmra.mrb[0].mxu0 %v130
    %v222 = vpop.f32.mrb[0].mxu0
    %v223 = vadd.f32 %v59, %v222
    %v224 = vpop.f32.mrb[0].mxu0
    %v225 = vpop.f32.mrb[0].mxu0
    %v226 = vadd.f32 %v59, %v225
    %v227 = vpop.f32.mrb[0].mxu0
    %228 = vdwg.mxu0
    %v229 = vmax.f32 %v167, 0.0
    %v230 = vmax.f32 %v170, 0.0
    %v231 = vmax.f32 %v175, 0.0
    %v232 = vmax.f32 %v178, 0.0
    %v233 = vmax.f32 %v183, 0.0
    %v234 = vmax.f32 %v186, 0.0
    %v235 = vmax.f32 %v191, 0.0
    %v236 = vmax.f32 %v194, 0.0
    %v237 = vmax.f32 %v199, 0.0
    %v238 = vmax.f32 %v202, 0.0
    %v239 = vmax.f32 %v207, 0.0
    %v240 = vmax.f32 %v210, 0.0
    %v241 = vmax.f32 %v215, 0.0
    %v242 = vmax.f32 %v218, 0.0
    %v243 = vmax.f32 %v223, 0.0
    %v244 = vmax.f32 %v226, 0.0
    %v245 = vpack.c.bf16 %v230, %v229
    %v246 = vpack.c.bf16 %v232, %v231
    %v247 = vpack.c.bf16 %v234, %v233
    %v248 = vpack.c.bf16 %v236, %v235
    %v249 = vpack.c.bf16 %v238, %v237
    %v250 = vpack.c.bf16 %v240, %v239
    %v251 = vpack.c.bf16 %v242, %v241
    %v252 = vpack.c.bf16 %v244, %v243
    %v253 = vld [vmem:[#allocation2] sm:$0xff]
    %v254 = vld [vmem:[#allocation2 + $0x8] sm:$0xff]
    %v255 = vld [vmem:[#allocation2 + $0x10] sm:$0xff]
    %v256 = vld [vmem:[#allocation2 + $0x18] sm:$0xff]
    %v257 = vld [vmem:[#allocation2 + $0x20] sm:$0xff]
    %v258 = vld [vmem:[#allocation2 + $0x28] sm:$0xff]
    %v259 = vld [vmem:[#allocation2 + $0x30] sm:$0xff]
    %v260 = vld [vmem:[#allocation2 + $0x38] sm:$0xff]
    %v261 = vld [vmem:[#allocation2 + $0x40] sm:$0xff]
    %v262 = vld [vmem:[#allocation2 + $0x48] sm:$0xff]
    %v263 = vld [vmem:[#allocation2 + $0x50] sm:$0xff]
    %v264 = vld [vmem:[#allocation2 + $0x58] sm:$0xff]
    %v265 = vld [vmem:[#allocation2 + $0x60] sm:$0xff]
    %v266 = vld [vmem:[#allocation2 + $0x68] sm:$0xff]
    %v267 = vld [vmem:[#allocation2 + $0x70] sm:$0xff]
    %v268 = vld [vmem:[#allocation2 + $0x78] sm:$0xff]
    %v269 = vld [vmem:[%s4] sm:$0x3]
    %v271 = vlaneseq
    %v272 = vshrl.u32 %v271, 7
    %v273 = vsub.s32 0, %v272
    %v274 = vrot.slane %v269, %v273
    %v275 = vlaneseq
    %v276 = vshrl.u32 %v275, 7
    %v277 = vsub.s32 1, %v276
    %v278 = vrot.slane %v269, %v277
    %v297 = vunpack.c.l.b16 %v253
    %v298 = vunpack.c.h.b16 %v253
    %v299 = vunpack.c.l.b16 %v254
    %v300 = vunpack.c.h.b16 %v254
    %v301 = vunpack.c.l.b16 %v255
    %v302 = vunpack.c.h.b16 %v255
    %v303 = vunpack.c.l.b16 %v256
    %v304 = vunpack.c.h.b16 %v256
    %v305 = vunpack.c.l.b16 %v257
    %v306 = vunpack.c.h.b16 %v257
    %v307 = vunpack.c.l.b16 %v258
    %v308 = vunpack.c.h.b16 %v258
    %v309 = vunpack.c.l.b16 %v259
    %v310 = vunpack.c.h.b16 %v259
    %v311 = vunpack.c.l.b16 %v260
    %v312 = vunpack.c.h.b16 %v260
    %v313 = vunpack.c.l.b16 %v261
    %v314 = vunpack.c.h.b16 %v261
    %v315 = vunpack.c.l.b16 %v262
    %v316 = vunpack.c.h.b16 %v262
    %v317 = vunpack.c.l.b16 %v263
    %v318 = vunpack.c.h.b16 %v263
    %v319 = vunpack.c.l.b16 %v264
    %v320 = vunpack.c.h.b16 %v264
    %v321 = vunpack.c.l.b16 %v265
    %v322 = vunpack.c.h.b16 %v265
    %v323 = vunpack.c.l.b16 %v266
    %v324 = vunpack.c.h.b16 %v266
    %v325 = vunpack.c.l.b16 %v267
    %v326 = vunpack.c.h.b16 %v267
    %v327 = vunpack.c.l.b16 %v268
    %v328 = vunpack.c.h.b16 %v268
    %v329 = vpack.c.b16 %v299, %v297
    %v330 = vpack.c.b16 %v300, %v298
    %v331 = vpack.c.b16 %v303, %v301
    %v332 = vpack.c.b16 %v304, %v302
    %v333 = vpack.c.b16 %v307, %v305
    %v334 = vpack.c.b16 %v308, %v306
    %v335 = vpack.c.b16 %v311, %v309
    %v336 = vpack.c.b16 %v312, %v310
    %v337 = vpack.c.b16 %v315, %v313
    %v338 = vpack.c.b16 %v316, %v314
    %v339 = vpack.c.b16 %v319, %v317
    %v340 = vpack.c.b16 %v320, %v318
    %v341 = vpack.c.b16 %v323, %v321
    %v342 = vpack.c.b16 %v324, %v322
    %v343 = vpack.c.b16 %v327, %v325
    %v344 = vpack.c.b16 %v328, %v326
    %361 = vmatprep.subr.bf16.mxu0 %v330
    %362 = vmatpush1.bf16.msra.mxu0 %v329
    %363 = vmatprep.subr.bf16.mxu0 %v332
    %364 = vmatpush1.bf16.msra.mxu0 %v331
    %365 = vmatprep.subr.bf16.mxu0 %v334
    %366 = vmatpush1.bf16.msra.mxu0 %v333
    %367 = vmatprep.subr.bf16.mxu0 %v336
    %368 = vmatpush1.bf16.msra.mxu0 %v335
    %369 = vmatprep.subr.bf16.mxu0 %v338
    %370 = vmatpush1.bf16.msra.mxu0 %v337
    %371 = vmatprep.subr.bf16.mxu0 %v340
    %372 = vmatpush1.bf16.msra.mxu0 %v339
    %373 = vmatprep.subr.bf16.mxu0 %v342
    %374 = vmatpush1.bf16.msra.mxu0 %v341
    %375 = vmatprep.subr.bf16.mxu0 %v344
    %376 = vmatpush1.bf16.msra.mxu0 %v343
    %377 = vmatprep.subr.bf16.mxu0 0
    %378 = vmatpush1.bf16.msra.mxu0 0
    %379 = vmatprep.subr.bf16.mxu0 0
    %380 = vmatpush1.bf16.msra.mxu0 0
    %381 = vmatprep.subr.bf16.mxu0 0
    %382 = vmatpush1.bf16.msra.mxu0 0
    %383 = vmatprep.subr.bf16.mxu0 0
    %384 = vmatpush1.bf16.msra.mxu0 0
    %385 = vmatprep.subr.bf16.mxu0 0
    %386 = vmatpush1.bf16.msra.mxu0 0
    %387 = vmatprep.subr.bf16.mxu0 0
    %388 = vmatpush1.bf16.msra.mxu0 0
    %389 = vmatprep.subr.bf16.mxu0 0
    %390 = vmatpush1.bf16.msra.mxu0 0
    %391 = vmatprep.subr.bf16.mxu0 0
    %392 = vmatpush1.bf16.msra.mxu0 0
    %393 = vmatprep.mubr.bf16.mxu0 0
    %394 = vmatmul.mubr.bf16.gmra.mrb[0].mxu0 %v245
    %v395 = vpop.f32.mrb[0].mxu0
    %v396 = vadd.f32 %v274, %v395
    %v397 = vpop.f32.mrb[0].mxu0
    %v398 = vadd.f32 %v278, %v397
    %v399 = vpop.f32.mrb[0].mxu0
    %v400 = vadd.f32 %v274, %v399
    %v401 = vpop.f32.mrb[0].mxu0
    %v402 = vadd.f32 %v278, %v401
    %403 = vmatprep.mubr.bf16.mxu0 0
    %404 = vmatmul.mubr.bf16.gmra.mrb[0].mxu0 %v246
    %v405 = vpop.f32.mrb[0].mxu0
    %v406 = vadd.f32 %v274, %v405
    %v407 = vpop.f32.mrb[0].mxu0
    %v408 = vadd.f32 %v278, %v407
    %v409 = vpop.f32.mrb[0].mxu0
    %v410 = vadd.f32 %v274, %v409
    %v411 = vpop.f32.mrb[0].mxu0
    %v412 = vadd.f32 %v278, %v411
    %413 = vmatprep.mubr.bf16.mxu0 0
    %414 = vmatmul.mubr.bf16.gmra.mrb[0].mxu0 %v247
    %v415 = vpop.f32.mrb[0].mxu0
    %v416 = vadd.f32 %v274, %v415
    %v417 = vpop.f32.mrb[0].mxu0
    %v418 = vadd.f32 %v278, %v417
    %v419 = vpop.f32.mrb[0].mxu0
    %v420 = vadd.f32 %v274, %v419
    %v421 = vpop.f32.mrb[0].mxu0
    %v422 = vadd.f32 %v278, %v421
    %423 = vmatprep.mubr.bf16.mxu0 0
    %424 = vmatmul.mubr.bf16.gmra.mrb[0].mxu0 %v248
    %v425 = vpop.f32.mrb[0].mxu0
    %v426 = vadd.f32 %v274, %v425
    %v427 = vpop.f32.mrb[0].mxu0
    %v428 = vadd.f32 %v278, %v427
    %v429 = vpop.f32.mrb[0].mxu0
    %v430 = vadd.f32 %v274, %v429
    %v431 = vpop.f32.mrb[0].mxu0
    %v432 = vadd.f32 %v278, %v431
    %433 = vmatprep.mubr.bf16.mxu0 0
    %434 = vmatmul.mubr.bf16.gmra.mrb[0].mxu0 %v249
    %v435 = vpop.f32.mrb[0].mxu0
    %v436 = vadd.f32 %v274, %v435
    %v437 = vpop.f32.mrb[0].mxu0
    %v438 = vadd.f32 %v278, %v437
    %v439 = vpop.f32.mrb[0].mxu0
    %v440 = vadd.f32 %v274, %v439
    %v441 = vpop.f32.mrb[0].mxu0
    %v442 = vadd.f32 %v278, %v441
    %443 = vmatprep.mubr.bf16.mxu0 0
    %444 = vmatmul.mubr.bf16.gmra.mrb[0].mxu0 %v250
    %v445 = vpop.f32.mrb[0].mxu0
    %v446 = vadd.f32 %v274, %v445
    %v447 = vpop.f32.mrb[0].mxu0
    %v448 = vadd.f32 %v278, %v447
    %v449 = vpop.f32.mrb[0].mxu0
    %v450 = vadd.f32 %v274, %v449
    %v451 = vpop.f32.mrb[0].mxu0
    %v452 = vadd.f32 %v278, %v451
    %453 = vmatprep.mubr.bf16.mxu0 0
    %454 = vmatmul.mubr.bf16.gmra.mrb[0].mxu0 %v251
    %v455 = vpop.f32.mrb[0].mxu0
    %v456 = vadd.f32 %v274, %v455
    %v457 = vpop.f32.mrb[0].mxu0
    %v458 = vadd.f32 %v278, %v457
    %v459 = vpop.f32.mrb[0].mxu0
    %v460 = vadd.f32 %v274, %v459
    %v461 = vpop.f32.mrb[0].mxu0
    %v462 = vadd.f32 %v278, %v461
    %463 = vmatprep.mubr.bf16.mxu0 0
    %464 = vmatmul.mubr.bf16.gmra.mrb[0].mxu0 %v252
    %v465 = vpop.f32.mrb[0].mxu0
    %v466 = vadd.f32 %v274, %v465
    %v467 = vpop.f32.mrb[0].mxu0
    %v468 = vadd.f32 %v278, %v467
    %v469 = vpop.f32.mrb[0].mxu0
    %v470 = vadd.f32 %v274, %v469
    %v471 = vpop.f32.mrb[0].mxu0
    %v472 = vadd.f32 %v278, %v471
    %473 = vdwg.mxu0
    %v474 = vsub.f32 0.0, %v396
    %v475 = vsub.f32 0.0, %v398
    %v476 = vsub.f32 0.0, %v400
    %v477 = vsub.f32 0.0, %v402
    %v478 = vsub.f32 0.0, %v406
    %v479 = vsub.f32 0.0, %v408
    %v480 = vsub.f32 0.0, %v410
    %v481 = vsub.f32 0.0, %v412
    %v482 = vsub.f32 0.0, %v416
    %v483 = vsub.f32 0.0, %v418
    %v484 = vsub.f32 0.0, %v420
    %v485 = vsub.f32 0.0, %v422
    %v486 = vsub.f32 0.0, %v426
    %v487 = vsub.f32 0.0, %v428
    %v488 = vsub.f32 0.0, %v430
    %v489 = vsub.f32 0.0, %v432
    %v490 = vsub.f32 0.0, %v436
    %v491 = vsub.f32 0.0, %v438
    %v492 = vsub.f32 0.0, %v440
    %v493 = vsub.f32 0.0, %v442
    %v494 = vsub.f32 0.0, %v446
    %v495 = vsub.f32 0.0, %v448
    %v496 = vsub.f32 0.0, %v450
    %v497 = vsub.f32 0.0, %v452
    %v498 = vsub.f32 0.0, %v456
    %v499 = vsub.f32 0.0, %v458
    %v500 = vsub.f32 0.0, %v460
    %v501 = vsub.f32 0.0, %v462
    %v502 = vsub.f32 0.0, %v466
    %v503 = vsub.f32 0.0, %v468
    %v504 = vsub.f32 0.0, %v470
    %v505 = vsub.f32 0.0, %v472
    %v506 = vmul.f32 %v474, 1.442695
    %v507 = vpow.pop %v506
    %v508 = vmul.f32 %v475, 1.442695
    %v509 = vpow.pop %v508
    %v510 = vmul.f32 %v476, 1.442695
    %v511 = vpow.pop %v510
    %v512 = vmul.f32 %v477, 1.442695
    %v513 = vpow.pop %v512
    %v514 = vmul.f32 %v478, 1.442695
    %v515 = vpow.pop %v514
    %v516 = vmul.f32 %v479, 1.442695
    %v517 = vpow.pop %v516
    %v518 = vmul.f32 %v480, 1.442695
    %v519 = vpow.pop %v518
    %v520 = vmul.f32 %v481, 1.442695
    %v521 = vpow.pop %v520
    %v522 = vmul.f32 %v482, 1.442695
    %v523 = vpow.pop %v522
    %v524 = vmul.f32 %v483, 1.442695
    %v525 = vpow.pop %v524
    %v526 = vmul.f32 %v484, 1.442695
    %v527 = vpow.pop %v526
    %v528 = vmul.f32 %v485, 1.442695
    %v529 = vpow.pop %v528
    %v530 = vmul.f32 %v486, 1.442695
    %v531 = vpow.pop %v530
    %v532 = vmul.f32 %v487, 1.442695
    %v533 = vpow.pop %v532
    %v534 = vmul.f32 %v488, 1.442695
    %v535 = vpow.pop %v534
    %v536 = vmul.f32 %v489, 1.442695
    %v537 = vpow.pop %v536
    %v538 = vmul.f32 %v490, 1.442695
    %v539 = vpow.pop %v538
    %v540 = vmul.f32 %v491, 1.442695
    %v541 = vpow.pop %v540
    %v542 = vmul.f32 %v492, 1.442695
    %v543 = vpow.pop %v542
    %v544 = vmul.f32 %v493, 1.442695
    %v545 = vpow.pop %v544
    %v546 = vmul.f32 %v494, 1.442695
    %v547 = vpow.pop %v546
    %v548 = vmul.f32 %v495, 1.442695
    %v549 = vpow.pop %v548
    %v550 = vmul.f32 %v496, 1.442695
    %v551 = vpow.pop %v550
    %v552 = vmul.f32 %v497, 1.442695
    %v553 = vpow.pop %v552
    %v554 = vmul.f32 %v498, 1.442695
    %v555 = vpow.pop %v554
    %v556 = vmul.f32 %v499, 1.442695
    %v557 = vpow.pop %v556
    %v558 = vmul.f32 %v500, 1.442695
    %v559 = vpow.pop %v558
    %v560 = vmul.f32 %v501, 1.442695
    %v561 = vpow.pop %v560
    %v562 = vmul.f32 %v502, 1.442695
    %v563 = vpow.pop %v562
    %v564 = vmul.f32 %v503, 1.442695
    %v565 = vpow.pop %v564
    %v566 = vmul.f32 %v504, 1.442695
    %v567 = vpow.pop %v566
    %v568 = vmul.f32 %v505, 1.442695
    %v569 = vpow.pop %v568
    %v570 = vadd.f32 %v507, 1.0
    %v571 = vadd.f32 %v509, 1.0
    %v572 = vadd.f32 %v511, 1.0
    %v573 = vadd.f32 %v513, 1.0
    %v574 = vadd.f32 %v515, 1.0
    %v575 = vadd.f32 %v517, 1.0
    %v576 = vadd.f32 %v519, 1.0
    %v577 = vadd.f32 %v521, 1.0
    %v578 = vadd.f32 %v523, 1.0
    %v579 = vadd.f32 %v525, 1.0
    %v580 = vadd.f32 %v527, 1.0
    %v581 = vadd.f32 %v529, 1.0
    %v582 = vadd.f32 %v531, 1.0
    %v583 = vadd.f32 %v533, 1.0
    %v584 = vadd.f32 %v535, 1.0
    %v585 = vadd.f32 %v537, 1.0
    %v586 = vadd.f32 %v539, 1.0
    %v587 = vadd.f32 %v541, 1.0
    %v588 = vadd.f32 %v543, 1.0
    %v589 = vadd.f32 %v545, 1.0
    %v590 = vadd.f32 %v547, 1.0
    %v591 = vadd.f32 %v549, 1.0
    %v592 = vadd.f32 %v551, 1.0
    %v593 = vadd.f32 %v553, 1.0
    %v594 = vadd.f32 %v555, 1.0
    %v595 = vadd.f32 %v557, 1.0
    %v596 = vadd.f32 %v559, 1.0
    %v597 = vadd.f32 %v561, 1.0
    %v598 = vadd.f32 %v563, 1.0
    %v599 = vadd.f32 %v565, 1.0
    %v600 = vadd.f32 %v567, 1.0
    %v601 = vadd.f32 %v569, 1.0
    %v602 = vrcp.pop %v570
    %v603 = vrcp.pop %v571
    %v604 = vrcp.pop %v572
    %v605 = vrcp.pop %v573
    %v606 = vrcp.pop %v574
    %v607 = vrcp.pop %v575
    %v608 = vrcp.pop %v576
    %v609 = vrcp.pop %v577
    %v610 = vrcp.pop %v578
    %v611 = vrcp.pop %v579
    %v612 = vrcp.pop %v580
    %v613 = vrcp.pop %v581
    %v614 = vrcp.pop %v582
    %v615 = vrcp.pop %v583
    %v616 = vrcp.pop %v584
    %v617 = vrcp.pop %v585
    %v618 = vrcp.pop %v586
    %v619 = vrcp.pop %v587
    %v620 = vrcp.pop %v588
    %v621 = vrcp.pop %v589
    %v622 = vrcp.pop %v590
    %v623 = vrcp.pop %v591
    %v624 = vrcp.pop %v592
    %v625 = vrcp.pop %v593
    %v626 = vrcp.pop %v594
    %v627 = vrcp.pop %v595
    %v628 = vrcp.pop %v596
    %v629 = vrcp.pop %v597
    %v630 = vrcp.pop %v598
    %v631 = vrcp.pop %v599
    %v632 = vrcp.pop %v600
    %v633 = vrcp.pop %v601
    %v634 = vpack.c.bf16 %v604, %v602
    %v635 = vpack.c.bf16 %v605, %v603
    %v636 = vpack.c.bf16 %v608, %v606
    %v637 = vpack.c.bf16 %v609, %v607
    %v638 = vpack.c.bf16 %v612, %v610
    %v639 = vpack.c.bf16 %v613, %v611
    %v640 = vpack.c.bf16 %v616, %v614
    %v641 = vpack.c.bf16 %v617, %v615
    %v642 = vpack.c.bf16 %v620, %v618
    %v643 = vpack.c.bf16 %v621, %v619
    %v644 = vpack.c.bf16 %v624, %v622
    %v645 = vpack.c.bf16 %v625, %v623
    %v646 = vpack.c.bf16 %v628, %v626
    %v647 = vpack.c.bf16 %v629, %v627
    %v648 = vpack.c.bf16 %v632, %v630
    %v649 = vpack.c.bf16 %v633, %v631
    %v666 = vunpack.c.l.b16 %v634
    %v667 = vunpack.c.l.b16 %v635
    %v668 = vunpack.c.h.b16 %v634
    %v669 = vunpack.c.h.b16 %v635
    %v670 = vunpack.c.l.b16 %v636
    %v671 = vunpack.c.l.b16 %v637
    %v672 = vunpack.c.h.b16 %v636
    %v673 = vunpack.c.h.b16 %v637
    %v674 = vunpack.c.l.b16 %v638
    %v675 = vunpack.c.l.b16 %v639
    %v676 = vunpack.c.h.b16 %v638
    %v677 = vunpack.c.h.b16 %v639
    %v678 = vunpack.c.l.b16 %v640
    %v679 = vunpack.c.l.b16 %v641
    %v680 = vunpack.c.h.b16 %v640
    %v681 = vunpack.c.h.b16 %v641
    %v682 = vunpack.c.l.b16 %v642
    %v683 = vunpack.c.l.b16 %v643
    %v684 = vunpack.c.h.b16 %v642
    %v685 = vunpack.c.h.b16 %v643
    %v686 = vunpack.c.l.b16 %v644
    %v687 = vunpack.c.l.b16 %v645
    %v688 = vunpack.c.h.b16 %v644
    %v689 = vunpack.c.h.b16 %v645
    %v690 = vunpack.c.l.b16 %v646
    %v691 = vunpack.c.l.b16 %v647
    %v692 = vunpack.c.h.b16 %v646
    %v693 = vunpack.c.h.b16 %v647
    %v694 = vunpack.c.l.b16 %v648
    %v695 = vunpack.c.l.b16 %v649
    %v696 = vunpack.c.h.b16 %v648
    %v697 = vunpack.c.h.b16 %v649
    %v698 = vpack.c.b16 %v667, %v666
    %v699 = vpack.c.b16 %v669, %v668
    %v700 = vpack.c.b16 %v671, %v670
    %v701 = vpack.c.b16 %v673, %v672
    %v702 = vpack.c.b16 %v675, %v674
    %v703 = vpack.c.b16 %v677, %v676
    %v704 = vpack.c.b16 %v679, %v678
    %v705 = vpack.c.b16 %v681, %v680
    %v706 = vpack.c.b16 %v683, %v682
    %v707 = vpack.c.b16 %v685, %v684
    %v708 = vpack.c.b16 %v687, %v686
    %v709 = vpack.c.b16 %v689, %v688
    %v710 = vpack.c.b16 %v691, %v690
    %v711 = vpack.c.b16 %v693, %v692
    %v712 = vpack.c.b16 %v695, %v694
    %v713 = vpack.c.b16 %v697, %v696
    %730 = vst [vmem:[#allocation5] sm:$0xff] %v698
    %731 = vst [vmem:[#allocation5 + $0x8] sm:$0xff] %v699
    %732 = vst [vmem:[#allocation5 + $0x10] sm:$0xff] %v700
    %733 = vst [vmem:[#allocation5 + $0x18] sm:$0xff] %v701
    %734 = vst [vmem:[#allocation5 + $0x20] sm:$0xff] %v702
    %735 = vst [vmem:[#allocation5 + $0x28] sm:$0xff] %v703
    %736 = vst [vmem:[#allocation5 + $0x30] sm:$0xff] %v704
    %737 = vst [vmem:[#allocation5 + $0x38] sm:$0xff] %v705
    %738 = vst [vmem:[#allocation5 + $0x40] sm:$0xff] %v706
    %739 = vst [vmem:[#allocation5 + $0x48] sm:$0xff] %v707
    %740 = vst [vmem:[#allocation5 + $0x50] sm:$0xff] %v708
    %741 = vst [vmem:[#allocation5 + $0x58] sm:$0xff] %v709
    %742 = vst [vmem:[#allocation5 + $0x60] sm:$0xff] %v710
    %743 = vst [vmem:[#allocation5 + $0x68] sm:$0xff] %v711
    %744 = vst [vmem:[#allocation5 + $0x70] sm:$0xff] %v712
    %745 = vst [vmem:[#allocation5 + $0x78] sm:$0xff] %v713
    // Predicated region
    $region26: #{tpu_custom_call.1} parent=1 // pred_check
      _
    $region27: #{tpu_custom_call.1} parent=1 // pred_check_branch
      %747 = sbr.rel (0) target = $region29
    $region28: #{tpu_custom_call.1} parent=1 // pred_region
      %s749 = ssub.s32 2048, 2048
      %750 = vsyncadd [#allocation4], %s749
      %s751 = sshll.u32 [#allocation5], 4
      %s752 = int_to_ptr.vmem [resolvable:$true] %s751
      %757 = dma.vmem_to_hbm [thread:$0]  %s752, 2048, %s5, [#allocation4], 128, 128, 8
    $region29: #{tpu_custom_call.1} parent=1 // pred_fallthru
      _
    // Predicated region
    $region30: #{tpu_custom_call.1} parent=1 // pred_check
      _
    $region31: #{tpu_custom_call.1} parent=1 // pred_check_branch
      %759 = sbr.rel (0) target = $region33
    $region32: #{tpu_custom_call.1} parent=1 // pred_region
      %760 = dma.done [#allocation4], 2048
    $region33: #{tpu_custom_call.1} parent=1 // pred_fallthru
      _
    %761 = vsyncpa [#allocation3], 1
    %762 = vsyncpa [#allocation4], 1

</llo_original>
